<compile_context>
chip_gen: v7x
topology: tpu7x:2x2x1
jax: 0.10.0
libtpu: 0.0.40
codegen_flags: <defaults>
</compile_context>

<pallas_src>
import functools

import jax
import jax.numpy as jnp
from jax.experimental import pallas as pl
from jax.experimental.pallas import tpu as pltpu

B, CIN, H, W = 2, 4, 16, 16
K = 3
FEAT = 32
NUM_CLASSES = 10

KKC = K * K * CIN          # 36  (im2col contraction dim)
KKC_PAD = 64               # padded contraction dim (sublane/lane friendly)
F_PAD = 128                # feature lanes padded to a full vreg lane width
C_PAD = 128                # class lanes padded to a full vreg lane width
HW = H * W


# ---------------- in-kernel helpers ----------------

def _feat_from_patches(patches, cw, cb, b, hw):
    # patches: (b*hw, KKC_PAD), cw: (KKC_PAD, F_PAD), cb: (1, F_PAD)
    h = jnp.dot(patches, cw, preferred_element_type=jnp.float32)   # MXU
    h = jnp.maximum(h + cb, 0.0)                                   # bias + ReLU (VPU)
    # Global average pool: (b*hw, F) -> (b, hw, F), reduce hw on the XLU.
    return jnp.sum(h.reshape(b, hw, F_PAD), axis=1) * (1.0 / hw)


def _logits_from_feat(feat, clw, clb):
    # feat: (b, F_PAD), clw: (F_PAD, C_PAD), clb: (1, C_PAD)
    return jnp.dot(feat, clw, preferred_element_type=jnp.float32) + clb


def _mean_xent(logits, yoh, b):
    # Stable log-softmax restricted to the first NUM_CLASSES lanes (rest is pad).
    lane = jax.lax.broadcasted_iota(jnp.int32, logits.shape, 1)
    valid = lane < NUM_CLASSES
    m = jnp.max(jnp.where(valid, logits, -jnp.inf), axis=-1, keepdims=True)
    z = logits - m
    e = jnp.where(valid, jnp.exp(z), 0.0)
    lse = jnp.log(jnp.sum(e, axis=-1, keepdims=True))
    nll = -jnp.sum(yoh * (z - lse), axis=-1, keepdims=True)        # (b, 1)
    # NOTE: normalize by the true (full) batch; valid while the whole batch
    # is processed in a single block.
    return jnp.sum(nll) * (1.0 / b)


# ---------------- Pallas kernels ----------------

def _make_fused_kernel(b, hw, with_loss):
    if with_loss:
        def kernel(patches_ref, cw_ref, cb_ref, clw_ref, clb_ref, yoh_ref,
                   logits_ref, loss_ref):
            feat = _feat_from_patches(patches_ref[...], cw_ref[...], cb_ref[...],
                                      b, hw)
            logits = _logits_from_feat(feat, clw_ref[...], clb_ref[...])
            logits_ref[...] = logits
            loss_ref[0, 0] = _mean_xent(logits, yoh_ref[...], b)
    else:
        def kernel(patches_ref, cw_ref, cb_ref, clw_ref, clb_ref, logits_ref):
            feat = _feat_from_patches(patches_ref[...], cw_ref[...], cb_ref[...],
                                      b, hw)
            logits_ref[...] = _logits_from_feat(feat, clw_ref[...], clb_ref[...])
    return kernel


def _make_classifier_kernel(b, with_loss):
    if with_loss:
        def kernel(feat_ref, clw_ref, clb_ref, yoh_ref, logits_ref, loss_ref):
            logits = _logits_from_feat(feat_ref[...], clw_ref[...], clb_ref[...])
            logits_ref[...] = logits
            loss_ref[0, 0] = _mean_xent(logits, yoh_ref[...], b)
    else:
        def kernel(feat_ref, clw_ref, clb_ref, logits_ref):
            logits_ref[...] = _logits_from_feat(feat_ref[...], clw_ref[...],
                                                clb_ref[...])
    return kernel


def _make_feature_kernel(b, hw):
    def kernel(patches_ref, cw_ref, cb_ref, feat_ref):
        feat_ref[...] = _feat_from_patches(patches_ref[...], cw_ref[...],
                                           cb_ref[...], b, hw)
    return kernel


# ---------------- wrapper glue (plain JAX, fused under jit) ----------------

def _pad2(a, rows, cols):
    return jnp.pad(a, ((0, rows - a.shape[0]), (0, cols - a.shape[1])))


def _pad_cols(a, cols):
    return jnp.pad(a, ((0, 0), (0, cols - a.shape[1])))


def _extract_patches(x_nchw):
    # NCHW -> NHWC -> im2col patches, zero-padded on the contraction dim.
    x = jnp.transpose(x_nchw, (0, 2, 3, 1)).astype(jnp.float32)
    b, h, w, c = x.shape
    xp = jnp.pad(x, ((0, 0), (1, 1), (1, 1), (0, 0)))
    taps = [xp[:, kh:kh + h, kw:kw + w, :] for kh in range(K) for kw in range(K)]
    p = jnp.stack(taps, axis=3).reshape(b * h * w, K * K * c)      # (b*h*w, KKC)
    return jnp.pad(p, ((0, 0), (0, KKC_PAD - K * K * c)))          # lane/sublane-aligned


def _padded_conv_params(conv_w, conv_b):
    cw = _pad2(conv_w.reshape(KKC, FEAT).astype(jnp.float32), KKC_PAD, F_PAD)
    cb = _pad_cols(conv_b.reshape(1, FEAT).astype(jnp.float32), F_PAD)
    return cw, cb


def _padded_cls_params(cls_w, cls_b):
    clw = _pad2(cls_w.astype(jnp.float32), F_PAD, C_PAD)
    clb = _pad_cols(cls_b.reshape(1, NUM_CLASSES).astype(jnp.float32), C_PAD)
    return clw, clb


def _fused_forward(params, x, y):
    b = x.shape[0]
    hw = x.shape[2] * x.shape[3]
    patches = _extract_patches(x)                                  # (b*hw, KKC_PAD)
    cw, cb = _padded_conv_params(params["conv_w"], params["conv_b"])
    clw, clb = _padded_cls_params(params["cls_w"], params["cls_b"])
    with_loss = y is not None

    in_specs = [
        pl.BlockSpec((b * hw, KKC_PAD), lambda i: (0, 0)),
        pl.BlockSpec((KKC_PAD, F_PAD), lambda i: (0, 0)),
        pl.BlockSpec((1, F_PAD), lambda i: (0, 0)),
        pl.BlockSpec((F_PAD, C_PAD), lambda i: (0, 0)),
        pl.BlockSpec((1, C_PAD), lambda i: (0, 0)),
    ]
    inputs = [patches, cw, cb, clw, clb]
    out_specs = pl.BlockSpec((b, C_PAD), lambda i: (0, 0))
    out_shape = jax.ShapeDtypeStruct((b, C_PAD), jnp.float32)

    if with_loss:
        yoh = jax.nn.one_hot(y, C_PAD, dtype=jnp.float32)          # padded lanes = 0
        in_specs.append(pl.BlockSpec((b, C_PAD), lambda i: (0, 0)))
        inputs.append(yoh)
        out_specs = (out_specs, pl.BlockSpec(memory_space=pltpu.MemorySpace.SMEM))
        out_shape = (out_shape, jax.ShapeDtypeStruct((1, 1), jnp.float32))

    result = pl.pallas_call(
        _make_fused_kernel(b, hw, with_loss),
        grid=(1,),
        in_specs=in_specs,
        out_specs=out_specs,
        out_shape=out_shape,
    )(*inputs)

    if with_loss:
        logits_pad, loss = result
        return logits_pad[:, :NUM_CLASSES], loss[0, 0]
    return result[:, :NUM_CLASSES]


def classify(feat, cls_w, cls_b, y=None):
    # Classifier-only path (used when skip_feature_extractor=True).
    b = feat.shape[0]
    feat_pad = _pad_cols(feat.astype(jnp.float32), F_PAD)
    clw, clb = _padded_cls_params(cls_w, cls_b)
    with_loss = y is not None

    in_specs = [
        pl.BlockSpec((b, F_PAD), lambda i: (0, 0)),
        pl.BlockSpec((F_PAD, C_PAD), lambda i: (0, 0)),
        pl.BlockSpec((1, C_PAD), lambda i: (0, 0)),
    ]
    inputs = [feat_pad, clw, clb]
    out_specs = pl.BlockSpec((b, C_PAD), lambda i: (0, 0))
    out_shape = jax.ShapeDtypeStruct((b, C_PAD), jnp.float32)

    if with_loss:
        yoh = jax.nn.one_hot(y, C_PAD, dtype=jnp.float32)
        in_specs.append(pl.BlockSpec((b, C_PAD), lambda i: (0, 0)))
        inputs.append(yoh)
        out_specs = (out_specs, pl.BlockSpec(memory_space=pltpu.MemorySpace.SMEM))
        out_shape = (out_shape, jax.ShapeDtypeStruct((1, 1), jnp.float32))

    result = pl.pallas_call(
        _make_classifier_kernel(b, with_loss),
        grid=(1,),
        in_specs=in_specs,
        out_specs=out_specs,
        out_shape=out_shape,
    )(*inputs)

    if with_loss:
        logits_pad, loss = result
        return logits_pad[:, :NUM_CLASSES], loss[0, 0]
    return result[:, :NUM_CLASSES]


@jax.jit
def get_features(x_nchw, conv_w, conv_b):
    # Standalone feature-extractor path (mirrors CombinedModule.get_features).
    # train_feat_ext only toggles .eval(); this feature extractor is stateless.
    b = x_nchw.shape[0]
    hw = x_nchw.shape[2] * x_nchw.shape[3]
    patches = _extract_patches(x_nchw)
    cw, cb = _padded_conv_params(conv_w, conv_b)
    feat_pad = pl.pallas_call(
        _make_feature_kernel(b, hw),
        grid=(1,),
        in_specs=[
            pl.BlockSpec((b * hw, KKC_PAD), lambda i: (0, 0)),
            pl.BlockSpec((KKC_PAD, F_PAD), lambda i: (0, 0)),
            pl.BlockSpec((1, F_PAD), lambda i: (0, 0)),
        ],
        out_specs=pl.BlockSpec((b, F_PAD), lambda i: (0, 0)),
        out_shape=jax.ShapeDtypeStruct((b, F_PAD), jnp.float32),
    )(patches, cw, cb)
    return feat_pad[:, :FEAT]


@functools.partial(jax.jit, static_argnames=("skip_feature_extractor",))
def combined_forward(params, x, y=None, skip_feature_extractor=False):
    # Mirrors CombinedModule.forward(x, y, skip_feature_extractor).
    if skip_feature_extractor:
        return classify(x, params["cls_w"], params["cls_b"], y)
    return _fused_forward(params, x, y)


# ---------------- reference (plain JAX) ----------------

def reference_forward(params, x, y):
    x_nhwc = jnp.transpose(x, (0, 2, 3, 1)).astype(jnp.float32)
    conv = jax.lax.conv_general_dilated(
        x_nhwc, params["conv_w"], (1, 1), "SAME",
        dimension_numbers=("NHWC", "HWIO", "NHWC"))
    h = jax.nn.relu(conv + params["conv_b"])
    feat = h.mean(axis=(1, 2))
    logits = feat @ params["cls_w"] + params["cls_b"]
    logp = jax.nn.log_softmax(logits, axis=-1)
    loss = -jnp.take_along_axis(logp, y[:, None], axis=-1).mean()
    return logits, loss, feat


if __name__ == "__main__":
    key = jax.random.PRNGKey(0)
    kx, kw1, kb1, kw2, kb2, ky = jax.random.split(key, 6)

    x = jax.random.normal(kx, (B, CIN, H, W), dtype=jnp.float32)   # NCHW like PyTorch
    y = jax.random.randint(ky, (B,), 0, NUM_CLASSES)

    params = {
        "conv_w": 0.1 * jax.random.normal(kw1, (K, K, CIN, FEAT), jnp.float32),  # HWIO
        "conv_b": 0.05 * jax.random.normal(kb1, (FEAT,), jnp.float32),
        "cls_w": 0.1 * jax.random.normal(kw2, (FEAT, NUM_CLASSES), jnp.float32),
        "cls_b": 0.05 * jax.random.normal(kb2, (NUM_CLASSES,), jnp.float32),
    }

    # fused forward with labels (feature extractor + classifier + loss)
    logits, loss = combined_forward(params, x, y)
    # inference path (no labels -> logits-only kernel variant)
    logits_only = combined_forward(params, x)
    # standalone feature extraction + skip_feature_extractor path
    feat = get_features(x, params["conv_w"], params["conv_b"])
    logits_skip = combined_forward(params, feat, skip_feature_extractor=True)
    logits_skip_l, loss_skip = combined_forward(params, feat, y,
                                                skip_feature_extractor=True)
    jax.block_until_ready((logits, loss, logits_only, feat,
                           logits_skip, logits_skip_l, loss_skip))

    # correctness check against plain-JAX reference
    ref_logits, ref_loss, ref_feat = reference_forward(params, x, y)
    assert jnp.allclose(logits, ref_logits, atol=1e-4, rtol=1e-4), "logits mismatch"
    assert jnp.allclose(loss, ref_loss, atol=1e-4, rtol=1e-4), "loss mismatch"
    assert jnp.allclose(logits_only, ref_logits, atol=1e-4, rtol=1e-4), "no-label mismatch"
    assert jnp.allclose(feat, ref_feat, atol=1e-4, rtol=1e-4), "feature mismatch"
    assert jnp.allclose(logits_skip, ref_logits, atol=1e-4, rtol=1e-4), "skip-path mismatch"
    assert jnp.allclose(loss_skip, ref_loss, atol=1e-4, rtol=1e-4), "skip-path loss mismatch"

    print("KERNEL_OK")
</pallas_src>

<mosaic_0001>
module attributes {stable_mosaic.version = 11 : i64} {
  func.func @kernel(%arg0: i32, %arg1: memref<512x64xf32, #tpu.memory_space<vmem>>, %arg2: memref<64x128xf32, #tpu.memory_space<vmem>>, %arg3: memref<1x128xf32, #tpu.memory_space<vmem>>, %arg4: memref<128x128xf32, #tpu.memory_space<vmem>>, %arg5: memref<1x128xf32, #tpu.memory_space<vmem>>, %arg6: memref<2x128xf32, #tpu.memory_space<vmem>>, %arg7: memref<2x128xf32, #tpu.memory_space<vmem>>, %arg8: memref<1x1xf32, #tpu.memory_space<smem>>) attributes {dimension_semantics = [#tpu.dimension_semantics<arbitrary>], iteration_bounds = array<i64: 1>, scalar_prefetch = 0 : i64, scratch_operands = 0 : i64, tpu.core_type = #tpu.core_type<tc>, window_params = [{pipeline_mode = #tpu.pipeline_mode<synchronous>, transform_indices = @transform_0, window_bounds = array<i64: 512, 64>}, {pipeline_mode = #tpu.pipeline_mode<synchronous>, transform_indices = @transform_1, window_bounds = array<i64: 64, 128>}, {pipeline_mode = #tpu.pipeline_mode<synchronous>, transform_indices = @transform_2, window_bounds = array<i64: 1, 128>}, {pipeline_mode = #tpu.pipeline_mode<synchronous>, transform_indices = @transform_3, window_bounds = array<i64: 128, 128>}, {pipeline_mode = #tpu.pipeline_mode<synchronous>, transform_indices = @transform_4, window_bounds = array<i64: 1, 128>}, {pipeline_mode = #tpu.pipeline_mode<synchronous>, transform_indices = @transform_5, window_bounds = array<i64: 2, 128>}, {pipeline_mode = #tpu.pipeline_mode<synchronous>, transform_indices = @transform_6, window_bounds = array<i64: 2, 128>}, {transform_indices = @transform_7, window_bounds = array<i64: 1, 1>}]} {
    %c0 = arith.constant 0 : index
    %c0_0 = arith.constant 0 : index
    %0 = vector.load %arg1[%c0, %c0_0] : memref<512x64xf32, #tpu.memory_space<vmem>>, vector<512x64xf32>
    %c0_1 = arith.constant 0 : index
    %c0_2 = arith.constant 0 : index
    %1 = vector.load %arg2[%c0_1, %c0_2] : memref<64x128xf32, #tpu.memory_space<vmem>>, vector<64x128xf32>
    %c0_3 = arith.constant 0 : index
    %c0_4 = arith.constant 0 : index
    %2 = vector.load %arg3[%c0_3, %c0_4] : memref<1x128xf32, #tpu.memory_space<vmem>>, vector<1x128xf32>
    %cst = arith.constant dense<0.000000e+00> : vector<512x128xf32>
    %3 = tpu.matmul %0, %1, %cst {dimension_numbers = #tpu.dot_dimension_numbers<[1], [0], [0], [1], [0, 0, 1, 1], [], []>} : vector<512x64xf32>, vector<64x128xf32>, vector<512x128xf32> -> vector<512x128xf32>
    %4 = vector.broadcast %2 : vector<1x128xf32> to vector<512x128xf32>
    %5 = arith.addf %3, %4 : vector<512x128xf32>
    %cst_5 = arith.constant 0.000000e+00 : f32
    %6 = vector.broadcast %cst_5 : f32 to vector<512x128xf32>
    %7 = arith.maximumf %5, %6 : vector<512x128xf32>
    %8 = vector.shape_cast %7 : vector<512x128xf32> to vector<2x256x128xf32>
    %cst_6 = arith.constant dense<0.000000e+00> : vector<2x128xf32>
    %9 = vector.multi_reduction <add>, %8, %cst_6 [1] : vector<2x256x128xf32> to vector<2x128xf32>
    %cst_7 = arith.constant 3.906250e-03 : f32
    %10 = vector.broadcast %cst_7 : f32 to vector<2x128xf32>
    %11 = arith.mulf %9, %10 : vector<2x128xf32>
    %c0_8 = arith.constant 0 : index
    %c0_9 = arith.constant 0 : index
    %12 = vector.load %arg4[%c0_8, %c0_9] : memref<128x128xf32, #tpu.memory_space<vmem>>, vector<128x128xf32>
    %c0_10 = arith.constant 0 : index
    %c0_11 = arith.constant 0 : index
    %13 = vector.load %arg5[%c0_10, %c0_11] : memref<1x128xf32, #tpu.memory_space<vmem>>, vector<1x128xf32>
    %cst_12 = arith.constant dense<0.000000e+00> : vector<2x128xf32>
    %14 = tpu.matmul %11, %12, %cst_12 {dimension_numbers = #tpu.dot_dimension_numbers<[1], [0], [0], [1], [0, 0, 1, 1], [], []>} : vector<2x128xf32>, vector<128x128xf32>, vector<2x128xf32> -> vector<2x128xf32>
    %15 = vector.broadcast %13 : vector<1x128xf32> to vector<2x128xf32>
    %16 = arith.addf %14, %15 : vector<2x128xf32>
    %c0_13 = arith.constant 0 : index
    %c0_14 = arith.constant 0 : index
    %17 = vector.load %arg7[%c0_13, %c0_14] : memref<2x128xf32, #tpu.memory_space<vmem>>, vector<2x128xf32>
    tpu.vector_store %arg7[%c0_13, %c0_14], %16 {strides = array<i32>} : memref<2x128xf32, #tpu.memory_space<vmem>>, vector<2x128xf32>,
    %c0_15 = arith.constant 0 : index
    %c0_16 = arith.constant 0 : index
    %18 = vector.load %arg6[%c0_15, %c0_16] : memref<2x128xf32, #tpu.memory_space<vmem>>, vector<2x128xf32>
    %19 = tpu.iota {dimensions = array<i32: 1>} : vector<2x128xi32>
    %c10_i32 = arith.constant 10 : i32
    %20 = vector.broadcast %c10_i32 : i32 to vector<2x128xi32>
    %21 = arith.cmpi slt, %19, %20 : vector<2x128xi32>
    %cst_17 = arith.constant 0xFF800000 : f32
    %22 = vector.broadcast %cst_17 : f32 to vector<2x128xf32>
    %23 = arith.select %21, %16, %22 : vector<2x128xi1>, vector<2x128xf32>
    %cst_18 = arith.constant dense<0xFF800000> : vector<2xf32>
    %24 = vector.multi_reduction <maximumf>, %23, %cst_18 [1] : vector<2x128xf32> to vector<2xf32>
    %25 = vector.shape_cast %24 : vector<2xf32> to vector<2x1xf32>
    %26 = vector.broadcast %25 : vector<2x1xf32> to vector<2x128xf32>
    %27 = arith.subf %16, %26 : vector<2x128xf32>
    %28 = math.exp %27 : vector<2x128xf32>
    %cst_19 = arith.constant 0.000000e+00 : f32
    %29 = vector.broadcast %cst_19 : f32 to vector<2x128xf32>
    %30 = arith.select %21, %28, %29 : vector<2x128xi1>, vector<2x128xf32>
    %cst_20 = arith.constant dense<0.000000e+00> : vector<2xf32>
    %31 = vector.multi_reduction <add>, %30, %cst_20 [1] : vector<2x128xf32> to vector<2xf32>
    %32 = vector.shape_cast %31 : vector<2xf32> to vector<2x1xf32>
    %33 = math.log %32 : vector<2x1xf32>
    %34 = vector.broadcast %33 : vector<2x1xf32> to vector<2x128xf32>
    %35 = arith.subf %27, %34 : vector<2x128xf32>
    %36 = arith.mulf %18, %35 : vector<2x128xf32>
    %cst_21 = arith.constant dense<0.000000e+00> : vector<2xf32>
    %37 = vector.multi_reduction <add>, %36, %cst_21 [1] : vector<2x128xf32> to vector<2xf32>
    %38 = vector.shape_cast %37 : vector<2xf32> to vector<2x1xf32>
    %cst_22 = arith.constant 0.000000e+00 : f32
    %39 = vector.broadcast %cst_22 : f32 to vector<2x1xf32>
    %40 = arith.subf %39, %38 : vector<2x1xf32>
    %41 = vector.shape_cast %40 : vector<2x1xf32> to vector<1x2x1xf32>
    %cst_23 = arith.constant dense<0.000000e+00> : vector<1xf32>
    %42 = vector.multi_reduction <add>, %41, %cst_23 [1, 2] : vector<1x2x1xf32> to vector<1xf32>
    %43 = vector.shape_cast %42 : vector<1xf32> to vector<1x1x1xf32>
    %44 = vector.extract %43[0, 0, 0] : f32 from vector<1x1x1xf32>
    %cst_24 = arith.constant 5.000000e-01 : f32
    %45 = arith.mulf %44, %cst_24 : f32
    %c0_25 = arith.constant 0 : index
    %c0_26 = arith.constant 0 : index
    %46 = memref.load %arg8[%c0_25, %c0_26] : memref<1x1xf32, #tpu.memory_space<smem>>
    memref.store %45, %arg8[%c0_25, %c0_26] : memref<1x1xf32, #tpu.memory_space<smem>>
    return
  }
  func.func @transform_0(%arg0: i32) -> (i32, i32) {
    %c0_i32 = arith.constant 0 : i32
    %c0_i32_0 = arith.constant 0 : i32
    %c0_i32_1 = arith.constant 0 : i32
    return %c0_i32, %c0_i32_0 : i32, i32
  }
  func.func @transform_1(%arg0: i32) -> (i32, i32) {
    %c0_i32 = arith.constant 0 : i32
    %c0_i32_0 = arith.constant 0 : i32
    %c0_i32_1 = arith.constant 0 : i32
    return %c0_i32, %c0_i32_0 : i32, i32
  }
  func.func @transform_2(%arg0: i32) -> (i32, i32) {
    %c0_i32 = arith.constant 0 : i32
    %c0_i32_0 = arith.constant 0 : i32
    %c0_i32_1 = arith.constant 0 : i32
    return %c0_i32, %c0_i32_0 : i32, i32
  }
  func.func @transform_3(%arg0: i32) -> (i32, i32) {
    %c0_i32 = arith.constant 0 : i32
    %c0_i32_0 = arith.constant 0 : i32
    %c0_i32_1 = arith.constant 0 : i32
    return %c0_i32, %c0_i32_0 : i32, i32
  }
  func.func @transform_4(%arg0: i32) -> (i32, i32) {
    %c0_i32 = arith.constant 0 : i32
    %c0_i32_0 = arith.constant 0 : i32
    %c0_i32_1 = arith.constant 0 : i32
    return %c0_i32, %c0_i32_0 : i32, i32
  }
  func.func @transform_5(%arg0: i32) -> (i32, i32) {
    %c0_i32 = arith.constant 0 : i32
    %c0_i32_0 = arith.constant 0 : i32
    %c0_i32_1 = arith.constant 0 : i32
    return %c0_i32, %c0_i32_0 : i32, i32
  }
  func.func @transform_6(%arg0: i32) -> (i32, i32) {
    %c0_i32 = arith.constant 0 : i32
    %c0_i32_0 = arith.constant 0 : i32
    %c0_i32_1 = arith.constant 0 : i32
    return %c0_i32, %c0_i32_0 : i32, i32
  }
  func.func @transform_7(%arg0: i32) -> (i32, i32) {
    %c0_i32 = arith.constant 0 : i32
    %c0_i32_0 = arith.constant 0 : i32
    %c0_i32_1 = arith.constant 0 : i32
    return %c0_i32, %c0_i32_0 : i32, i32
  }
}

</mosaic_0001>

<llo_original>
// kernel: combined_forward.1
$region0: #{combined_forward.1}
  #allocation0 [shape = 'u32[]', space=smem, size = 0x4, offset = 0x4, fixed_abs, tag = 'smem constant byte address 0x4 - core index']
  #allocation1 [shape = 'u32[144,128]{1,0:T(1,128)}', space=vmem, size = 0x12000, scoped, tag = 'internal scratch']
  %s0 = inlined_call_operand.vmem [shape: f32[512,64], index: 0, kind: input, shape index: {}]
  %s1 = inlined_call_operand.vmem [shape: f32[64,128], index: 1, kind: input, shape index: {}]
  %s2 = inlined_call_operand.vmem [shape: f32[1,128], index: 2, kind: input, shape index: {}]
  %s3 = inlined_call_operand.vmem [shape: f32[128,128], index: 3, kind: input, shape index: {}]
  %s4 = inlined_call_operand.vmem [shape: f32[1,128], index: 4, kind: input, shape index: {}]
  %s5 = inlined_call_operand.vmem [shape: f32[2,128], index: 5, kind: input, shape index: {}]
  %s6 = inlined_call_operand.hbm [shape: f32[2,128], index: 6, kind: output, shape index: {0}]
  %s7 = inlined_call_operand.hbm [shape: f32[1,1], index: 7, kind: output, shape index: {1}]
  %8 = xla_tuple %s6, %s7
  %s9 = sld [smem:[#allocation0]]
  $region42: #{combined_forward.1} parent=0
    _
  %s11 = ssub.s32 1, %s9
  %s12 = scalar_select 0, %s11, %s9
  $region1: #{combined_forward.1} parent=0
    #allocation2 [shape = 'u8[1024]{0}', space=vmem, size = 0x400, scoped, tag = 'output window, operand 0, single buffered']
    #allocation3 [shape = 's32[1]{0}', space=sflag, size = 0x4, scoped, tag = 'scoped memory for combined_forward.1']
    #allocation4 [shape = 's32[1]{0}', space=sflag, size = 0x4, scoped, tag = 'scoped memory for combined_forward.1']
    #allocation5 [shape = 'u8[512]{0}', space=smem, size = 0x200, scoped, tag = 'output window, operand 1, single buffered']
    %13 = vsyncpa [#allocation3], 0
    %14 = vsyncpa [#allocation4], 0
    // Predicated region
    $region2: #{combined_forward.1} parent=1 // pred_check
      _
    $region3: #{combined_forward.1} parent=1 // pred_check_branch
      %16 = sbr.rel (0) target = $region5
    $region4: #{combined_forward.1} parent=1 // pred_region
      _
    $region5: #{combined_forward.1} parent=1 // pred_fallthru
      _
    // Predicated region
    $region6: #{combined_forward.1} parent=1 // pred_check
      _
    $region7: #{combined_forward.1} parent=1 // pred_check_branch
      %18 = sbr.rel (0) target = $region9
    $region8: #{combined_forward.1} parent=1 // pred_region
      _
    $region9: #{combined_forward.1} parent=1 // pred_fallthru
      _
    // Predicated region
    $region10: #{combined_forward.1} parent=1 // pred_check
      _
    $region11: #{combined_forward.1} parent=1 // pred_check_branch
      %20 = sbr.rel (0) target = $region13
    $region12: #{combined_forward.1} parent=1 // pred_region
      _
    $region13: #{combined_forward.1} parent=1 // pred_fallthru
      _
    // Predicated region
    $region14: #{combined_forward.1} parent=1 // pred_check
      _
    $region15: #{combined_forward.1} parent=1 // pred_check_branch
      %22 = sbr.rel (0) target = $region17
    $region16: #{combined_forward.1} parent=1 // pred_region
      _
    $region17: #{combined_forward.1} parent=1 // pred_fallthru
      _
    // Predicated region
    $region18: #{combined_forward.1} parent=1 // pred_check
      _
    $region19: #{combined_forward.1} parent=1 // pred_check_branch
      %24 = sbr.rel (0) target = $region21
    $region20: #{combined_forward.1} parent=1 // pred_region
      _
    $region21: #{combined_forward.1} parent=1 // pred_fallthru
      _
    // Predicated region
    $region22: #{combined_forward.1} parent=1 // pred_check
      _
    $region23: #{combined_forward.1} parent=1 // pred_check_branch
      %26 = sbr.rel (0) target = $region25
    $region24: #{combined_forward.1} parent=1 // pred_region
      _
    $region25: #{combined_forward.1} parent=1 // pred_fallthru
      _
    %v27 = vld [vmem:[%s0] sm:$0xff]
    %v28 = vld [vmem:[%s0 + $0x8] sm:$0xff]
    %v29 = vld [vmem:[%s0 + $0x10] sm:$0xff]
    %v30 = vld [vmem:[%s0 + $0x18] sm:$0xff]
    %v31 = vld [vmem:[%s0 + $0x20] sm:$0xff]
    %v32 = vld [vmem:[%s0 + $0x28] sm:$0xff]
    %v33 = vld [vmem:[%s0 + $0x30] sm:$0xff]
    %v34 = vld [vmem:[%s0 + $0x38] sm:$0xff]
    %v35 = vld [vmem:[%s0 + $0x40] sm:$0xff]
    %v36 = vld [vmem:[%s0 + $0x48] sm:$0xff]
    %v37 = vld [vmem:[%s0 + $0x50] sm:$0xff]
    %v38 = vld [vmem:[%s0 + $0x58] sm:$0xff]
    %v39 = vld [vmem:[%s0 + $0x60] sm:$0xff]
    %v40 = vld [vmem:[%s0 + $0x68] sm:$0xff]
    %v41 = vld [vmem:[%s0 + $0x70] sm:$0xff]
    %v42 = vld [vmem:[%s0 + $0x78] sm:$0xff]
    %v43 = vld [vmem:[%s0 + $0x80] sm:$0xff]
    %v44 = vld [vmem:[%s0 + $0x88] sm:$0xff]
    %v45 = vld [vmem:[%s0 + $0x90] sm:$0xff]
    %v46 = vld [vmem:[%s0 + $0x98] sm:$0xff]
    %v47 = vld [vmem:[%s0 + $0xa0] sm:$0xff]
    %v48 = vld [vmem:[%s0 + $0xa8] sm:$0xff]
    %v49 = vld [vmem:[%s0 + $0xb0] sm:$0xff]
    %v50 = vld [vmem:[%s0 + $0xb8] sm:$0xff]
    %v51 = vld [vmem:[%s0 + $0xc0] sm:$0xff]
    %v52 = vld [vmem:[%s0 + $0xc8] sm:$0xff]
    %v53 = vld [vmem:[%s0 + $0xd0] sm:$0xff]
    %v54 = vld [vmem:[%s0 + $0xd8] sm:$0xff]
    %v55 = vld [vmem:[%s0 + $0xe0] sm:$0xff]
    %v56 = vld [vmem:[%s0 + $0xe8] sm:$0xff]
    %v57 = vld [vmem:[%s0 + $0xf0] sm:$0xff]
    %v58 = vld [vmem:[%s0 + $0xf8] sm:$0xff]
    %v59 = vld [vmem:[%s0 + $0x100] sm:$0xff]
    %v60 = vld [vmem:[%s0 + $0x108] sm:$0xff]
    %v61 = vld [vmem:[%s0 + $0x110] sm:$0xff]
    %v62 = vld [vmem:[%s0 + $0x118] sm:$0xff]
    %v63 = vld [vmem:[%s0 + $0x120] sm:$0xff]
    %v64 = vld [vmem:[%s0 + $0x128] sm:$0xff]
    %v65 = vld [vmem:[%s0 + $0x130] sm:$0xff]
    %v66 = vld [vmem:[%s0 + $0x138] sm:$0xff]
    %v67 = vld [vmem:[%s0 + $0x140] sm:$0xff]
    %v68 = vld [vmem:[%s0 + $0x148] sm:$0xff]
    %v69 = vld [vmem:[%s0 + $0x150] sm:$0xff]
    %v70 = vld [vmem:[%s0 + $0x158] sm:$0xff]
    %v71 = vld [vmem:[%s0 + $0x160] sm:$0xff]
    %v72 = vld [vmem:[%s0 + $0x168] sm:$0xff]
    %v73 = vld [vmem:[%s0 + $0x170] sm:$0xff]
    %v74 = vld [vmem:[%s0 + $0x178] sm:$0xff]
    %v75 = vld [vmem:[%s0 + $0x180] sm:$0xff]
    %v76 = vld [vmem:[%s0 + $0x188] sm:$0xff]
    %v77 = vld [vmem:[%s0 + $0x190] sm:$0xff]
    %v78 = vld [vmem:[%s0 + $0x198] sm:$0xff]
    %v79 = vld [vmem:[%s0 + $0x1a0] sm:$0xff]
    %v80 = vld [vmem:[%s0 + $0x1a8] sm:$0xff]
    %v81 = vld [vmem:[%s0 + $0x1b0] sm:$0xff]
    %v82 = vld [vmem:[%s0 + $0x1b8] sm:$0xff]
    %v83 = vld [vmem:[%s0 + $0x1c0] sm:$0xff]
    %v84 = vld [vmem:[%s0 + $0x1c8] sm:$0xff]
    %v85 = vld [vmem:[%s0 + $0x1d0] sm:$0xff]
    %v86 = vld [vmem:[%s0 + $0x1d8] sm:$0xff]
    %v87 = vld [vmem:[%s0 + $0x1e0] sm:$0xff]
    %v88 = vld [vmem:[%s0 + $0x1e8] sm:$0xff]
    %v89 = vld [vmem:[%s0 + $0x1f0] sm:$0xff]
    %v90 = vld [vmem:[%s0 + $0x1f8] sm:$0xff]
    %v91 = vld [vmem:[%s1] sm:$0xff]
    %v92 = vld [vmem:[%s1 + $0x8] sm:$0xff]
    %v93 = vld [vmem:[%s1 + $0x10] sm:$0xff]
    %v94 = vld [vmem:[%s1 + $0x18] sm:$0xff]
    %v95 = vld [vmem:[%s1 + $0x20] sm:$0xff]
    %v96 = vld [vmem:[%s1 + $0x28] sm:$0xff]
    %v97 = vld [vmem:[%s1 + $0x30] sm:$0xff]
    %v98 = vld [vmem:[%s1 + $0x38] sm:$0xff]
    %v99 = vld [vmem:[%s2] sm:$0x1]
    %v101 = vlaneseq
    %v102 = vshrl.u32 %v101, 7
    %v103 = vsub.s32 0, %v102
    %v104 = vrot.slane %v99, %v103
    %vm106 = vcmask 523264
    %v108 = vsel %vm106, %v27, 0
    %v111 = vsel %vm106, %v28, 0
    %v114 = vsel %vm106, %v29, 0
    %v117 = vsel %vm106, %v30, 0
    %v120 = vsel %vm106, %v31, 0
    %v123 = vsel %vm106, %v32, 0
    %v126 = vsel %vm106, %v33, 0
    %v129 = vsel %vm106, %v34, 0
    %v132 = vsel %vm106, %v35, 0
    %v135 = vsel %vm106, %v36, 0
    %v138 = vsel %vm106, %v37, 0
    %v141 = vsel %vm106, %v38, 0
    %v144 = vsel %vm106, %v39, 0
    %v147 = vsel %vm106, %v40, 0
    %v150 = vsel %vm106, %v41, 0
    %v153 = vsel %vm106, %v42, 0
    %v156 = vsel %vm106, %v43, 0
    %v159 = vsel %vm106, %v44, 0
    %v162 = vsel %vm106, %v45, 0
    %v165 = vsel %vm106, %v46, 0
    %v168 = vsel %vm106, %v47, 0
    %v171 = vsel %vm106, %v48, 0
    %v174 = vsel %vm106, %v49, 0
    %v177 = vsel %vm106, %v50, 0
    %v180 = vsel %vm106, %v51, 0
    %v183 = vsel %vm106, %v52, 0
    %v186 = vsel %vm106, %v53, 0
    %v189 = vsel %vm106, %v54, 0
    %v192 = vsel %vm106, %v55, 0
    %v195 = vsel %vm106, %v56, 0
    %v198 = vsel %vm106, %v57, 0
    %v201 = vsel %vm106, %v58, 0
    %v204 = vsel %vm106, %v59, 0
    %v207 = vsel %vm106, %v60, 0
    %v210 = vsel %vm106, %v61, 0
    %v213 = vsel %vm106, %v62, 0
    %v216 = vsel %vm106, %v63, 0
    %v219 = vsel %vm106, %v64, 0
    %v222 = vsel %vm106, %v65, 0
    %v225 = vsel %vm106, %v66, 0
    %v228 = vsel %vm106, %v67, 0
    %v231 = vsel %vm106, %v68, 0
    %v234 = vsel %vm106, %v69, 0
    %v237 = vsel %vm106, %v70, 0
    %v240 = vsel %vm106, %v71, 0
    %v243 = vsel %vm106, %v72, 0
    %v246 = vsel %vm106, %v73, 0
    %v249 = vsel %vm106, %v74, 0
    %v252 = vsel %vm106, %v75, 0
    %v255 = vsel %vm106, %v76, 0
    %v258 = vsel %vm106, %v77, 0
    %v261 = vsel %vm106, %v78, 0
    %v264 = vsel %vm106, %v79, 0
    %v267 = vsel %vm106, %v80, 0
    %v270 = vsel %vm106, %v81, 0
    %v273 = vsel %vm106, %v82, 0
    %v276 = vsel %vm106, %v83, 0
    %v279 = vsel %vm106, %v84, 0
    %v282 = vsel %vm106, %v85, 0
    %v285 = vsel %vm106, %v86, 0
    %v288 = vsel %vm106, %v87, 0
    %v291 = vsel %vm106, %v88, 0
    %v294 = vsel %vm106, %v89, 0
    %v297 = vsel %vm106, %v90, 0
    %299 = vmatprep.subr.mxu0 0.0
    %300 = vmatpush1.msra.mxu0 %v91
    %301 = vmatprep.subr.mxu0 0.0
    %302 = vmatpush1.msra.mxu0 %v92
    %303 = vmatprep.subr.mxu0 0.0
    %304 = vmatpush1.msra.mxu0 %v93
    %305 = vmatprep.subr.mxu0 0.0
    %306 = vmatpush1.msra.mxu0 %v94
    %307 = vmatprep.subr.mxu0 0.0
    %308 = vmatpush1.msra.mxu0 %v95
    %309 = vmatprep.subr.mxu0 0.0
    %310 = vmatpush1.msra.mxu0 %v96
    %311 = vmatprep.subr.mxu0 0.0
    %312 = vmatpush1.msra.mxu0 %v97
    %313 = vmatprep.subr.mxu0 0.0
    %314 = vmatpush1.msra.mxu0 %v98
    %315 = vmatprep.subr.mxu0 0.0
    %316 = vmatpush1.msra.mxu0 0.0
    %317 = vmatprep.subr.mxu0 0.0
    %318 = vmatpush1.msra.mxu0 0.0
    %319 = vmatprep.subr.mxu0 0.0
    %320 = vmatpush1.msra.mxu0 0.0
    %321 = vmatprep.subr.mxu0 0.0
    %322 = vmatpush1.msra.mxu0 0.0
    %323 = vmatprep.subr.mxu0 0.0
    %324 = vmatpush1.msra.mxu0 0.0
    %325 = vmatprep.subr.mxu0 0.0
    %326 = vmatpush1.msra.mxu0 0.0
    %327 = vmatprep.subr.mxu0 0.0
    %328 = vmatpush1.msra.mxu0 0.0
    %329 = vmatprep.subr.mxu0 0.0
    %330 = vmatpush1.msra.mxu0 0.0
    %331 = vmatprep.subr.mxu0 0.0
    %332 = vmatpush1.msra.mxu0 0.0
    %333 = vmatprep.subr.mxu0 0.0
    %334 = vmatpush1.msra.mxu0 0.0
    %335 = vmatprep.subr.mxu0 0.0
    %336 = vmatpush1.msra.mxu0 0.0
    %337 = vmatprep.subr.mxu0 0.0
    %338 = vmatpush1.msra.mxu0 0.0
    %339 = vmatprep.subr.mxu0 0.0
    %340 = vmatpush1.msra.mxu0 0.0
    %341 = vmatprep.subr.mxu0 0.0
    %342 = vmatpush1.msra.mxu0 0.0
    %343 = vmatprep.subr.mxu0 0.0
    %344 = vmatpush1.msra.mxu0 0.0
    %345 = vmatprep.subr.mxu0 0.0
    %346 = vmatpush1.msra.mxu0 0.0
    %347 = vmatprep.subr.mxu0 0.0
    %348 = vmatpush1.msra.mxu0 0.0
    %349 = vmatprep.subr.mxu0 0.0
    %350 = vmatpush1.msra.mxu0 0.0
    %351 = vmatprep.subr.mxu0 0.0
    %352 = vmatpush1.msra.mxu0 0.0
    %353 = vmatprep.subr.mxu0 0.0
    %354 = vmatpush1.msra.mxu0 0.0
    %355 = vmatprep.subr.mxu0 0.0
    %356 = vmatpush1.msra.mxu0 0.0
    %357 = vmatprep.subr.mxu0 0.0
    %358 = vmatpush1.msra.mxu0 0.0
    %359 = vmatprep.subr.mxu0 0.0
    %360 = vmatpush1.msra.mxu0 0.0
    %361 = vmatprep.subr.mxu0 0.0
    %362 = vmatpush1.msra.mxu0 0.0
    %363 = vmatprep.mubr.f32.mxu0 0.0
    %364 = vmatmul.mubr.f32.gmra.mrb[0].mxu0 %v108
    %v365 = vpop.f32.mrb[0].mxu0
    %v366 = vadd.f32 %v104, %v365
    %v367 = vpop.f32.mrb[0].mxu0
    %368 = vmatprep.mubr.f32.mxu0 0.0
    %369 = vmatmul.mubr.f32.gmra.mrb[0].mxu0 %v111
    %v370 = vpop.f32.mrb[0].mxu0
    %v371 = vadd.f32 %v104, %v370
    %v372 = vpop.f32.mrb[0].mxu0
    %373 = vmatprep.mubr.f32.mxu0 0.0
    %374 = vmatmul.mubr.f32.gmra.mrb[0].mxu0 %v114
    %v375 = vpop.f32.mrb[0].mxu0
    %v376 = vadd.f32 %v104, %v375
    %v377 = vpop.f32.mrb[0].mxu0
    %378 = vmatprep.mubr.f32.mxu0 0.0
    %379 = vmatmul.mubr.f32.gmra.mrb[0].mxu0 %v117
    %v380 = vpop.f32.mrb[0].mxu0
    %v381 = vadd.f32 %v104, %v380
    %v382 = vpop.f32.mrb[0].mxu0
    %383 = vmatprep.mubr.f32.mxu0 0.0
    %384 = vmatmul.mubr.f32.gmra.mrb[0].mxu0 %v120
    %v385 = vpop.f32.mrb[0].mxu0
    %v386 = vadd.f32 %v104, %v385
    %v387 = vpop.f32.mrb[0].mxu0
    %388 = vmatprep.mubr.f32.mxu0 0.0
    %389 = vmatmul.mubr.f32.gmra.mrb[0].mxu0 %v123
    %v390 = vpop.f32.mrb[0].mxu0
    %v391 = vadd.f32 %v104, %v390
    %v392 = vpop.f32.mrb[0].mxu0
    %393 = vmatprep.mubr.f32.mxu0 0.0
    %394 = vmatmul.mubr.f32.gmra.mrb[0].mxu0 %v126
    %v395 = vpop.f32.mrb[0].mxu0
    %v396 = vadd.f32 %v104, %v395
    %v397 = vpop.f32.mrb[0].mxu0
    %398 = vmatprep.mubr.f32.mxu0 0.0
    %399 = vmatmul.mubr.f32.gmra.mrb[0].mxu0 %v129
    %v400 = vpop.f32.mrb[0].mxu0
    %v401 = vadd.f32 %v104, %v400
    %v402 = vpop.f32.mrb[0].mxu0
    %403 = vmatprep.mubr.f32.mxu0 0.0
    %404 = vmatmul.mubr.f32.gmra.mrb[0].mxu0 %v132
    %v405 = vpop.f32.mrb[0].mxu0
    %v406 = vadd.f32 %v104, %v405
    %v407 = vpop.f32.mrb[0].mxu0
    %408 = vmatprep.mubr.f32.mxu0 0.0
    %409 = vmatmul.mubr.f32.gmra.mrb[0].mxu0 %v135
    %v410 = vpop.f32.mrb[0].mxu0
    %v411 = vadd.f32 %v104, %v410
    %v412 = vpop.f32.mrb[0].mxu0
    %413 = vmatprep.mubr.f32.mxu0 0.0
    %414 = vmatmul.mubr.f32.gmra.mrb[0].mxu0 %v138
    %v415 = vpop.f32.mrb[0].mxu0
    %v416 = vadd.f32 %v104, %v415
    %v417 = vpop.f32.mrb[0].mxu0
    %418 = vmatprep.mubr.f32.mxu0 0.0
    %419 = vmatmul.mubr.f32.gmra.mrb[0].mxu0 %v141
    %v420 = vpop.f32.mrb[0].mxu0
    %v421 = vadd.f32 %v104, %v420
    %v422 = vpop.f32.mrb[0].mxu0
    %423 = vmatprep.mubr.f32.mxu0 0.0
    %424 = vmatmul.mubr.f32.gmra.mrb[0].mxu0 %v144
    %v425 = vpop.f32.mrb[0].mxu0
    %v426 = vadd.f32 %v104, %v425
    %v427 = vpop.f32.mrb[0].mxu0
    %428 = vmatprep.mubr.f32.mxu0 0.0
    %429 = vmatmul.mubr.f32.gmra.mrb[0].mxu0 %v147
    %v430 = vpop.f32.mrb[0].mxu0
    %v431 = vadd.f32 %v104, %v430
    %v432 = vpop.f32.mrb[0].mxu0
    %433 = vmatprep.mubr.f32.mxu0 0.0
    %434 = vmatmul.mubr.f32.gmra.mrb[0].mxu0 %v150
    %v435 = vpop.f32.mrb[0].mxu0
    %v436 = vadd.f32 %v104, %v435
    %v437 = vpop.f32.mrb[0].mxu0
    %438 = vmatprep.mubr.f32.mxu0 0.0
    %439 = vmatmul.mubr.f32.gmra.mrb[0].mxu0 %v153
    %v440 = vpop.f32.mrb[0].mxu0
    %v441 = vadd.f32 %v104, %v440
    %v442 = vpop.f32.mrb[0].mxu0
    %443 = vmatprep.mubr.f32.mxu0 0.0
    %444 = vmatmul.mubr.f32.gmra.mrb[0].mxu0 %v156
    %v445 = vpop.f32.mrb[0].mxu0
    %v446 = vadd.f32 %v104, %v445
    %v447 = vpop.f32.mrb[0].mxu0
    %448 = vmatprep.mubr.f32.mxu0 0.0
    %449 = vmatmul.mubr.f32.gmra.mrb[0].mxu0 %v159
    %v450 = vpop.f32.mrb[0].mxu0
    %v451 = vadd.f32 %v104, %v450
    %v452 = vpop.f32.mrb[0].mxu0
    %453 = vmatprep.mubr.f32.mxu0 0.0
    %454 = vmatmul.mubr.f32.gmra.mrb[0].mxu0 %v162
    %v455 = vpop.f32.mrb[0].mxu0
    %v456 = vadd.f32 %v104, %v455
    %v457 = vpop.f32.mrb[0].mxu0
    %458 = vmatprep.mubr.f32.mxu0 0.0
    %459 = vmatmul.mubr.f32.gmra.mrb[0].mxu0 %v165
    %v460 = vpop.f32.mrb[0].mxu0
    %v461 = vadd.f32 %v104, %v460
    %v462 = vpop.f32.mrb[0].mxu0
    %463 = vmatprep.mubr.f32.mxu0 0.0
    %464 = vmatmul.mubr.f32.gmra.mrb[0].mxu0 %v168
    %v465 = vpop.f32.mrb[0].mxu0
    %v466 = vadd.f32 %v104, %v465
    %v467 = vpop.f32.mrb[0].mxu0
    %468 = vmatprep.mubr.f32.mxu0 0.0
    %469 = vmatmul.mubr.f32.gmra.mrb[0].mxu0 %v171
    %v470 = vpop.f32.mrb[0].mxu0
    %v471 = vadd.f32 %v104, %v470
    %v472 = vpop.f32.mrb[0].mxu0
    %473 = vmatprep.mubr.f32.mxu0 0.0
    %474 = vmatmul.mubr.f32.gmra.mrb[0].mxu0 %v174
    %v475 = vpop.f32.mrb[0].mxu0
    %v476 = vadd.f32 %v104, %v475
    %v477 = vpop.f32.mrb[0].mxu0
    %478 = vmatprep.mubr.f32.mxu0 0.0
    %479 = vmatmul.mubr.f32.gmra.mrb[0].mxu0 %v177
    %v480 = vpop.f32.mrb[0].mxu0
    %v481 = vadd.f32 %v104, %v480
    %v482 = vpop.f32.mrb[0].mxu0
    %483 = vmatprep.mubr.f32.mxu0 0.0
    %484 = vmatmul.mubr.f32.gmra.mrb[0].mxu0 %v180
    %v485 = vpop.f32.mrb[0].mxu0
    %v486 = vadd.f32 %v104, %v485
    %v487 = vpop.f32.mrb[0].mxu0
    %488 = vmatprep.mubr.f32.mxu0 0.0
    %489 = vmatmul.mubr.f32.gmra.mrb[0].mxu0 %v183
    %v490 = vpop.f32.mrb[0].mxu0
    %v491 = vadd.f32 %v104, %v490
    %v492 = vpop.f32.mrb[0].mxu0
    %493 = vmatprep.mubr.f32.mxu0 0.0
    %494 = vmatmul.mubr.f32.gmra.mrb[0].mxu0 %v186
    %v495 = vpop.f32.mrb[0].mxu0
    %v496 = vadd.f32 %v104, %v495
    %v497 = vpop.f32.mrb[0].mxu0
    %498 = vmatprep.mubr.f32.mxu0 0.0
    %499 = vmatmul.mubr.f32.gmra.mrb[0].mxu0 %v189
    %v500 = vpop.f32.mrb[0].mxu0
    %v501 = vadd.f32 %v104, %v500
    %v502 = vpop.f32.mrb[0].mxu0
    %503 = vmatprep.mubr.f32.mxu0 0.0
    %504 = vmatmul.mubr.f32.gmra.mrb[0].mxu0 %v192
    %v505 = vpop.f32.mrb[0].mxu0
    %v506 = vadd.f32 %v104, %v505
    %v507 = vpop.f32.mrb[0].mxu0
    %508 = vmatprep.mubr.f32.mxu0 0.0
    %509 = vmatmul.mubr.f32.gmra.mrb[0].mxu0 %v195
    %v510 = vpop.f32.mrb[0].mxu0
    %v511 = vadd.f32 %v104, %v510
    %v512 = vpop.f32.mrb[0].mxu0
    %513 = vmatprep.mubr.f32.mxu0 0.0
    %514 = vmatmul.mubr.f32.gmra.mrb[0].mxu0 %v198
    %v515 = vpop.f32.mrb[0].mxu0
    %v516 = vadd.f32 %v104, %v515
    %v517 = vpop.f32.mrb[0].mxu0
    %518 = vmatprep.mubr.f32.mxu0 0.0
    %519 = vmatmul.mubr.f32.gmra.mrb[0].mxu0 %v201
    %v520 = vpop.f32.mrb[0].mxu0
    %v521 = vadd.f32 %v104, %v520
    %v522 = vpop.f32.mrb[0].mxu0
    %523 = vmatprep.mubr.f32.mxu0 0.0
    %524 = vmatmul.mubr.f32.gmra.mrb[0].mxu0 %v204
    %v525 = vpop.f32.mrb[0].mxu0
    %v526 = vadd.f32 %v104, %v525
    %v527 = vpop.f32.mrb[0].mxu0
    %528 = vmatprep.mubr.f32.mxu0 0.0
    %529 = vmatmul.mubr.f32.gmra.mrb[0].mxu0 %v207
    %v530 = vpop.f32.mrb[0].mxu0
    %v531 = vadd.f32 %v104, %v530
    %v532 = vpop.f32.mrb[0].mxu0
    %533 = vmatprep.mubr.f32.mxu0 0.0
    %534 = vmatmul.mubr.f32.gmra.mrb[0].mxu0 %v210
    %v535 = vpop.f32.mrb[0].mxu0
    %v536 = vadd.f32 %v104, %v535
    %v537 = vpop.f32.mrb[0].mxu0
    %538 = vmatprep.mubr.f32.mxu0 0.0
    %539 = vmatmul.mubr.f32.gmra.mrb[0].mxu0 %v213
    %v540 = vpop.f32.mrb[0].mxu0
    %v541 = vadd.f32 %v104, %v540
    %v542 = vpop.f32.mrb[0].mxu0
    %543 = vmatprep.mubr.f32.mxu0 0.0
    %544 = vmatmul.mubr.f32.gmra.mrb[0].mxu0 %v216
    %v545 = vpop.f32.mrb[0].mxu0
    %v546 = vadd.f32 %v104, %v545
    %v547 = vpop.f32.mrb[0].mxu0
    %548 = vmatprep.mubr.f32.mxu0 0.0
    %549 = vmatmul.mubr.f32.gmra.mrb[0].mxu0 %v219
    %v550 = vpop.f32.mrb[0].mxu0
    %v551 = vadd.f32 %v104, %v550
    %v552 = vpop.f32.mrb[0].mxu0
    %553 = vmatprep.mubr.f32.mxu0 0.0
    %554 = vmatmul.mubr.f32.gmra.mrb[0].mxu0 %v222
    %v555 = vpop.f32.mrb[0].mxu0
    %v556 = vadd.f32 %v104, %v555
    %v557 = vpop.f32.mrb[0].mxu0
    %558 = vmatprep.mubr.f32.mxu0 0.0
    %559 = vmatmul.mubr.f32.gmra.mrb[0].mxu0 %v225
    %v560 = vpop.f32.mrb[0].mxu0
    %v561 = vadd.f32 %v104, %v560
    %v562 = vpop.f32.mrb[0].mxu0
    %563 = vmatprep.mubr.f32.mxu0 0.0
    %564 = vmatmul.mubr.f32.gmra.mrb[0].mxu0 %v228
    %v565 = vpop.f32.mrb[0].mxu0
    %v566 = vadd.f32 %v104, %v565
    %v567 = vpop.f32.mrb[0].mxu0
    %568 = vmatprep.mubr.f32.mxu0 0.0
    %569 = vmatmul.mubr.f32.gmra.mrb[0].mxu0 %v231
    %v570 = vpop.f32.mrb[0].mxu0
    %v571 = vadd.f32 %v104, %v570
    %v572 = vpop.f32.mrb[0].mxu0
    %573 = vmatprep.mubr.f32.mxu0 0.0
    %574 = vmatmul.mubr.f32.gmra.mrb[0].mxu0 %v234
    %v575 = vpop.f32.mrb[0].mxu0
    %v576 = vadd.f32 %v104, %v575
    %v577 = vpop.f32.mrb[0].mxu0
    %578 = vmatprep.mubr.f32.mxu0 0.0
    %579 = vmatmul.mubr.f32.gmra.mrb[0].mxu0 %v237
    %v580 = vpop.f32.mrb[0].mxu0
    %v581 = vadd.f32 %v104, %v580
    %v582 = vpop.f32.mrb[0].mxu0
    %583 = vmatprep.mubr.f32.mxu0 0.0
    %584 = vmatmul.mubr.f32.gmra.mrb[0].mxu0 %v240
    %v585 = vpop.f32.mrb[0].mxu0
    %v586 = vadd.f32 %v104, %v585
    %v587 = vpop.f32.mrb[0].mxu0
    %588 = vmatprep.mubr.f32.mxu0 0.0
    %589 = vmatmul.mubr.f32.gmra.mrb[0].mxu0 %v243
    %v590 = vpop.f32.mrb[0].mxu0
    %v591 = vadd.f32 %v104, %v590
    %v592 = vpop.f32.mrb[0].mxu0
    %593 = vmatprep.mubr.f32.mxu0 0.0
    %594 = vmatmul.mubr.f32.gmra.mrb[0].mxu0 %v246
    %v595 = vpop.f32.mrb[0].mxu0
    %v596 = vadd.f32 %v104, %v595
    %v597 = vpop.f32.mrb[0].mxu0
    %598 = vmatprep.mubr.f32.mxu0 0.0
    %599 = vmatmul.mubr.f32.gmra.mrb[0].mxu0 %v249
    %v600 = vpop.f32.mrb[0].mxu0
    %v601 = vadd.f32 %v104, %v600
    %v602 = vpop.f32.mrb[0].mxu0
    %603 = vmatprep.mubr.f32.mxu0 0.0
    %604 = vmatmul.mubr.f32.gmra.mrb[0].mxu0 %v252
    %v605 = vpop.f32.mrb[0].mxu0
    %v606 = vadd.f32 %v104, %v605
    %v607 = vpop.f32.mrb[0].mxu0
    %608 = vmatprep.mubr.f32.mxu0 0.0
    %609 = vmatmul.mubr.f32.gmra.mrb[0].mxu0 %v255
    %v610 = vpop.f32.mrb[0].mxu0
    %v611 = vadd.f32 %v104, %v610
    %v612 = vpop.f32.mrb[0].mxu0
    %613 = vmatprep.mubr.f32.mxu0 0.0
    %614 = vmatmul.mubr.f32.gmra.mrb[0].mxu0 %v258
    %v615 = vpop.f32.mrb[0].mxu0
    %v616 = vadd.f32 %v104, %v615
    %v617 = vpop.f32.mrb[0].mxu0
    %618 = vmatprep.mubr.f32.mxu0 0.0
    %619 = vmatmul.mubr.f32.gmra.mrb[0].mxu0 %v261
    %v620 = vpop.f32.mrb[0].mxu0
    %v621 = vadd.f32 %v104, %v620
    %v622 = vpop.f32.mrb[0].mxu0
    %623 = vmatprep.mubr.f32.mxu0 0.0
    %624 = vmatmul.mubr.f32.gmra.mrb[0].mxu0 %v264
    %v625 = vpop.f32.mrb[0].mxu0
    %v626 = vadd.f32 %v104, %v625
    %v627 = vpop.f32.mrb[0].mxu0
    %628 = vmatprep.mubr.f32.mxu0 0.0
    %629 = vmatmul.mubr.f32.gmra.mrb[0].mxu0 %v267
    %v630 = vpop.f32.mrb[0].mxu0
    %v631 = vadd.f32 %v104, %v630
    %v632 = vpop.f32.mrb[0].mxu0
    %633 = vmatprep.mubr.f32.mxu0 0.0
    %634 = vmatmul.mubr.f32.gmra.mrb[0].mxu0 %v270
    %v635 = vpop.f32.mrb[0].mxu0
    %v636 = vadd.f32 %v104, %v635
    %v637 = vpop.f32.mrb[0].mxu0
    %638 = vmatprep.mubr.f32.mxu0 0.0
    %639 = vmatmul.mubr.f32.gmra.mrb[0].mxu0 %v273
    %v640 = vpop.f32.mrb[0].mxu0
    %v641 = vadd.f32 %v104, %v640
    %v642 = vpop.f32.mrb[0].mxu0
    %643 = vmatprep.mubr.f32.mxu0 0.0
    %644 = vmatmul.mubr.f32.gmra.mrb[0].mxu0 %v276
    %v645 = vpop.f32.mrb[0].mxu0
    %v646 = vadd.f32 %v104, %v645
    %v647 = vpop.f32.mrb[0].mxu0
    %648 = vmatprep.mubr.f32.mxu0 0.0
    %649 = vmatmul.mubr.f32.gmra.mrb[0].mxu0 %v279
    %v650 = vpop.f32.mrb[0].mxu0
    %v651 = vadd.f32 %v104, %v650
    %v652 = vpop.f32.mrb[0].mxu0
    %653 = vmatprep.mubr.f32.mxu0 0.0
    %654 = vmatmul.mubr.f32.gmra.mrb[0].mxu0 %v282
    %v655 = vpop.f32.mrb[0].mxu0
    %v656 = vadd.f32 %v104, %v655
    %v657 = vpop.f32.mrb[0].mxu0
    %658 = vmatprep.mubr.f32.mxu0 0.0
    %659 = vmatmul.mubr.f32.gmra.mrb[0].mxu0 %v285
    %v660 = vpop.f32.mrb[0].mxu0
    %v661 = vadd.f32 %v104, %v660
    %v662 = vpop.f32.mrb[0].mxu0
    %663 = vmatprep.mubr.f32.mxu0 0.0
    %664 = vmatmul.mubr.f32.gmra.mrb[0].mxu0 %v288
    %v665 = vpop.f32.mrb[0].mxu0
    %v666 = vadd.f32 %v104, %v665
    %v667 = vpop.f32.mrb[0].mxu0
    %668 = vmatprep.mubr.f32.mxu0 0.0
    %669 = vmatmul.mubr.f32.gmra.mrb[0].mxu0 %v291
    %v670 = vpop.f32.mrb[0].mxu0
    %v671 = vadd.f32 %v104, %v670
    %v672 = vpop.f32.mrb[0].mxu0
    %673 = vmatprep.mubr.f32.mxu0 0.0
    %674 = vmatmul.mubr.f32.gmra.mrb[0].mxu0 %v294
    %v675 = vpop.f32.mrb[0].mxu0
    %v676 = vadd.f32 %v104, %v675
    %v677 = vpop.f32.mrb[0].mxu0
    %678 = vmatprep.mubr.f32.mxu0 0.0
    %679 = vmatmul.mubr.f32.gmra.mrb[0].mxu0 %v297
    %v680 = vpop.f32.mrb[0].mxu0
    %v681 = vadd.f32 %v104, %v680
    %v682 = vpop.f32.mrb[0].mxu0
    %683 = vdwg.mxu0
    %v684 = vmax.f32 %v366, 0.0
    %v685 = vmax.f32 %v371, 0.0
    %v686 = vmax.f32 %v376, 0.0
    %v687 = vmax.f32 %v381, 0.0
    %v688 = vmax.f32 %v386, 0.0
    %v689 = vmax.f32 %v391, 0.0
    %v690 = vmax.f32 %v396, 0.0
    %v691 = vmax.f32 %v401, 0.0
    %v692 = vmax.f32 %v406, 0.0
    %v693 = vmax.f32 %v411, 0.0
    %v694 = vmax.f32 %v416, 0.0
    %v695 = vmax.f32 %v421, 0.0
    %v696 = vmax.f32 %v426, 0.0
    %v697 = vmax.f32 %v431, 0.0
    %v698 = vmax.f32 %v436, 0.0
    %v699 = vmax.f32 %v441, 0.0
    %v700 = vmax.f32 %v446, 0.0
    %v701 = vmax.f32 %v451, 0.0
    %v702 = vmax.f32 %v456, 0.0
    %v703 = vmax.f32 %v461, 0.0
    %v704 = vmax.f32 %v466, 0.0
    %v705 = vmax.f32 %v471, 0.0
    %v706 = vmax.f32 %v476, 0.0
    %v707 = vmax.f32 %v481, 0.0
    %v708 = vmax.f32 %v486, 0.0
    %v709 = vmax.f32 %v491, 0.0
    %v710 = vmax.f32 %v496, 0.0
    %v711 = vmax.f32 %v501, 0.0
    %v712 = vmax.f32 %v506, 0.0
    %v713 = vmax.f32 %v511, 0.0
    %v714 = vmax.f32 %v516, 0.0
    %v715 = vmax.f32 %v521, 0.0
    %v716 = vmax.f32 %v526, 0.0
    %v717 = vmax.f32 %v531, 0.0
    %v718 = vmax.f32 %v536, 0.0
    %v719 = vmax.f32 %v541, 0.0
    %v720 = vmax.f32 %v546, 0.0
    %v721 = vmax.f32 %v551, 0.0
    %v722 = vmax.f32 %v556, 0.0
    %v723 = vmax.f32 %v561, 0.0
    %v724 = vmax.f32 %v566, 0.0
    %v725 = vmax.f32 %v571, 0.0
    %v726 = vmax.f32 %v576, 0.0
    %v727 = vmax.f32 %v581, 0.0
    %v728 = vmax.f32 %v586, 0.0
    %v729 = vmax.f32 %v591, 0.0
    %v730 = vmax.f32 %v596, 0.0
    %v731 = vmax.f32 %v601, 0.0
    %v732 = vmax.f32 %v606, 0.0
    %v733 = vmax.f32 %v611, 0.0
    %v734 = vmax.f32 %v616, 0.0
    %v735 = vmax.f32 %v621, 0.0
    %v736 = vmax.f32 %v626, 0.0
    %v737 = vmax.f32 %v631, 0.0
    %v738 = vmax.f32 %v636, 0.0
    %v739 = vmax.f32 %v641, 0.0
    %v740 = vmax.f32 %v646, 0.0
    %v741 = vmax.f32 %v651, 0.0
    %v742 = vmax.f32 %v656, 0.0
    %v743 = vmax.f32 %v661, 0.0
    %v744 = vmax.f32 %v666, 0.0
    %v745 = vmax.f32 %v671, 0.0
    %v746 = vmax.f32 %v676, 0.0
    %v747 = vmax.f32 %v681, 0.0
    %v748 = vadd.f32 %v684, %v685
    %v749 = vadd.f32 %v748, %v686
    %v750 = vadd.f32 %v749, %v687
    %v751 = vadd.f32 %v750, %v688
    %v752 = vadd.f32 %v751, %v689
    %v753 = vadd.f32 %v752, %v690
    %v754 = vadd.f32 %v753, %v691
    %v755 = vadd.f32 %v754, %v692
    %v756 = vadd.f32 %v755, %v693
    %v757 = vadd.f32 %v756, %v694
    %v758 = vadd.f32 %v757, %v695
    %v759 = vadd.f32 %v758, %v696
    %v760 = vadd.f32 %v759, %v697
    %v761 = vadd.f32 %v760, %v698
    %v762 = vadd.f32 %v761, %v699
    %v763 = vadd.f32 %v762, %v700
    %v764 = vadd.f32 %v763, %v701
    %v765 = vadd.f32 %v764, %v702
    %v766 = vadd.f32 %v765, %v703
    %v767 = vadd.f32 %v766, %v704
    %v768 = vadd.f32 %v767, %v705
    %v769 = vadd.f32 %v768, %v706
    %v770 = vadd.f32 %v769, %v707
    %v771 = vadd.f32 %v770, %v708
    %v772 = vadd.f32 %v771, %v709
    %v773 = vadd.f32 %v772, %v710
    %v774 = vadd.f32 %v773, %v711
    %v775 = vadd.f32 %v774, %v712
    %v776 = vadd.f32 %v775, %v713
    %v777 = vadd.f32 %v776, %v714
    %v778 = vadd.f32 %v777, %v715
    %v779 = vrot.slane %v778, 4
    %v780 = vadd.f32 %v778, %v779
    %v781 = vrot.slane %v780, 2
    %v782 = vadd.f32 %v780, %v781
    %v783 = vrot.slane %v782, 1
    %v784 = vadd.f32 %v782, %v783
    %v785 = vadd.f32 %v716, %v717
    %v786 = vadd.f32 %v785, %v718
    %v787 = vadd.f32 %v786, %v719
    %v788 = vadd.f32 %v787, %v720
    %v789 = vadd.f32 %v788, %v721
    %v790 = vadd.f32 %v789, %v722
    %v791 = vadd.f32 %v790, %v723
    %v792 = vadd.f32 %v791, %v724
    %v793 = vadd.f32 %v792, %v725
    %v794 = vadd.f32 %v793, %v726
    %v795 = vadd.f32 %v794, %v727
    %v796 = vadd.f32 %v795, %v728
    %v797 = vadd.f32 %v796, %v729
    %v798 = vadd.f32 %v797, %v730
    %v799 = vadd.f32 %v798, %v731
    %v800 = vadd.f32 %v799, %v732
    %v801 = vadd.f32 %v800, %v733
    %v802 = vadd.f32 %v801, %v734
    %v803 = vadd.f32 %v802, %v735
    %v804 = vadd.f32 %v803, %v736
    %v805 = vadd.f32 %v804, %v737
    %v806 = vadd.f32 %v805, %v738
    %v807 = vadd.f32 %v806, %v739
    %v808 = vadd.f32 %v807, %v740
    %v809 = vadd.f32 %v808, %v741
    %v810 = vadd.f32 %v809, %v742
    %v811 = vadd.f32 %v810, %v743
    %v812 = vadd.f32 %v811, %v744
    %v813 = vadd.f32 %v812, %v745
    %v814 = vadd.f32 %v813, %v746
    %v815 = vadd.f32 %v814, %v747
    %v816 = vrot.slane %v815, 4
    %v817 = vadd.f32 %v815, %v816
    %v818 = vrot.slane %v817, 2
    %v819 = vadd.f32 %v817, %v818
    %v820 = vrot.slane %v819, 1
    %v821 = vadd.f32 %v819, %v820
    %v822 = vmul.f32 %v784, 0.00390625
    %v823 = vmul.f32 %v821, 0.00390625
    %v824 = vld [vmem:[%s3] sm:$0xff]
    %v825 = vld [vmem:[%s3 + $0x8] sm:$0xff]
    %v826 = vld [vmem:[%s3 + $0x10] sm:$0xff]
    %v827 = vld [vmem:[%s3 + $0x18] sm:$0xff]
    %v828 = vld [vmem:[%s3 + $0x20] sm:$0xff]
    %v829 = vld [vmem:[%s3 + $0x28] sm:$0xff]
    %v830 = vld [vmem:[%s3 + $0x30] sm:$0xff]
    %v831 = vld [vmem:[%s3 + $0x38] sm:$0xff]
    %v832 = vld [vmem:[%s3 + $0x40] sm:$0xff]
    %v833 = vld [vmem:[%s3 + $0x48] sm:$0xff]
    %v834 = vld [vmem:[%s3 + $0x50] sm:$0xff]
    %v835 = vld [vmem:[%s3 + $0x58] sm:$0xff]
    %v836 = vld [vmem:[%s3 + $0x60] sm:$0xff]
    %v837 = vld [vmem:[%s3 + $0x68] sm:$0xff]
    %v838 = vld [vmem:[%s3 + $0x70] sm:$0xff]
    %v839 = vld [vmem:[%s3 + $0x78] sm:$0xff]
    %v840 = vld [vmem:[%s4] sm:$0x1]
    %v842 = vlaneseq
    %v843 = vshrl.u32 %v842, 7
    %v844 = vsub.s32 0, %v843
    %v845 = vrot.slane %v840, %v844
    %vm849 = vcmask 1041409
    %v850 = vsel %vm849, %v823, %v822
    %852 = vmatprep.subr.mxu0 0.0
    %853 = vmatpush1.msra.mxu0 %v824
    %854 = vmatprep.subr.mxu0 0.0
    %855 = vmatpush1.msra.mxu0 %v825
    %856 = vmatprep.subr.mxu0 0.0
    %857 = vmatpush1.msra.mxu0 %v826
    %858 = vmatprep.subr.mxu0 0.0
    %859 = vmatpush1.msra.mxu0 %v827
    %860 = vmatprep.subr.mxu0 0.0
    %861 = vmatpush1.msra.mxu0 %v828
    %862 = vmatprep.subr.mxu0 0.0
    %863 = vmatpush1.msra.mxu0 %v829
    %864 = vmatprep.subr.mxu0 0.0
    %865 = vmatpush1.msra.mxu0 %v830
    %866 = vmatprep.subr.mxu0 0.0
    %867 = vmatpush1.msra.mxu0 %v831
    %868 = vmatprep.subr.mxu0 0.0
    %869 = vmatpush1.msra.mxu0 %v832
    %870 = vmatprep.subr.mxu0 0.0
    %871 = vmatpush1.msra.mxu0 %v833
    %872 = vmatprep.subr.mxu0 0.0
    %873 = vmatpush1.msra.mxu0 %v834
    %874 = vmatprep.subr.mxu0 0.0
    %875 = vmatpush1.msra.mxu0 %v835
    %876 = vmatprep.subr.mxu0 0.0
    %877 = vmatpush1.msra.mxu0 %v836
    %878 = vmatprep.subr.mxu0 0.0
    %879 = vmatpush1.msra.mxu0 %v837
    %880 = vmatprep.subr.mxu0 0.0
    %881 = vmatpush1.msra.mxu0 %v838
    %882 = vmatprep.subr.mxu0 0.0
    %883 = vmatpush1.msra.mxu0 %v839
    %884 = vmatprep.subr.mxu0 0.0
    %885 = vmatpush1.msra.mxu0 0.0
    %886 = vmatprep.subr.mxu0 0.0
    %887 = vmatpush1.msra.mxu0 0.0
    %888 = vmatprep.subr.mxu0 0.0
    %889 = vmatpush1.msra.mxu0 0.0
    %890 = vmatprep.subr.mxu0 0.0
    %891 = vmatpush1.msra.mxu0 0.0
    %892 = vmatprep.subr.mxu0 0.0
    %893 = vmatpush1.msra.mxu0 0.0
    %894 = vmatprep.subr.mxu0 0.0
    %895 = vmatpush1.msra.mxu0 0.0
    %896 = vmatprep.subr.mxu0 0.0
    %897 = vmatpush1.msra.mxu0 0.0
    %898 = vmatprep.subr.mxu0 0.0
    %899 = vmatpush1.msra.mxu0 0.0
    %900 = vmatprep.subr.mxu0 0.0
    %901 = vmatpush1.msra.mxu0 0.0
    %902 = vmatprep.subr.mxu0 0.0
    %903 = vmatpush1.msra.mxu0 0.0
    %904 = vmatprep.subr.mxu0 0.0
    %905 = vmatpush1.msra.mxu0 0.0
    %906 = vmatprep.subr.mxu0 0.0
    %907 = vmatpush1.msra.mxu0 0.0
    %908 = vmatprep.subr.mxu0 0.0
    %909 = vmatpush1.msra.mxu0 0.0
    %910 = vmatprep.subr.mxu0 0.0
    %911 = vmatpush1.msra.mxu0 0.0
    %912 = vmatprep.subr.mxu0 0.0
    %913 = vmatpush1.msra.mxu0 0.0
    %914 = vmatprep.subr.mxu0 0.0
    %915 = vmatpush1.msra.mxu0 0.0
    %916 = vmatprep.mubr.f32.mxu0 0.0
    %917 = vmatmul.mubr.f32.gmra.mrb[0].mxu0 %v850
    %v918 = vpop.f32.mrb[0].mxu0
    %v919 = vadd.f32 %v845, %v918
    %v920 = vpop.f32.mrb[0].mxu0
    %921 = vdwg.mxu0
    %922 = vst [vmem:[#allocation2] sm:$0x3] %v919
    %v923 = vld [vmem:[%s5] sm:$0x3]
    %v924 = vlaneseq
    %v925 = vand.u32 %v924, 127
    %vm926 = vcmp.lt.s32.totalorder %v925, 10
    %v927 = vsel %vm926, %v919, -inf
    %vm928 = vcmask 1041408
    %v929 = vsel %vm928, %v927, -inf
    %930 = vmax.xlane.f32.xlu0 %v929
    %v931 = vpop.xlane.xlu0 %930
    %v932 = vsub.f32 %v919, %v931
    %v933 = vmul.f32 %v932, 1.442695
    %v934 = vpow.pop %v933
    %v935 = vsel %vm926, %v934, 0.0
    %v936 = vsel %vm928, %v935, 0.0
    %937 = vadd.xlane.f32.xlu0 %v936
    %v938 = vpop.xlane.xlu0 %937
    %v939 = vlog2.pop %v938
    %v940 = vmul.f32 %v939, 0.6931472
    %v941 = vsub.f32 %v932, %v940
    %v942 = vmul.f32 %v923, %v941
    %v943 = vsel %vm928, %v942, 0.0
    %944 = vadd.xlane.f32.xlu0 %v943
    %v945 = vpop.xlane.xlu0 %944
    %v946 = vsub.f32 0.0, %v945
    %vm947 = vcmask 1024
    %v948 = vsel %vm947, %v946, 0.0
    %949 = vadd.xlane.f32.xlu0 %v948
    %v950 = vpop.xlane.xlu0 %949
    %v951 = vrot.slane %v950, 4
    %v952 = vadd.f32 %v950, %v951
    %v953 = vrot.slane %v952, 2
    %v954 = vadd.f32 %v952, %v953
    %v955 = vrot.slane %v954, 1
    %v956 = vadd.f32 %v954, %v955
    %s957 = vtos %v956
    %s958 = smul.f32 %s957, 0.5
    %s959 = scalar_lea.smem [#allocation5], 0
    %960 = sst [smem:[%s959]] %s958
    // Predicated region
    $region26: #{combined_forward.1} parent=1 // pred_check
      _
    $region27: #{combined_forward.1} parent=1 // pred_check_branch
      %962 = sbr.rel (0) target = $region29
    $region28: #{combined_forward.1} parent=1 // pred_region
      %s964 = ssub.s32 32, 32
      %965 = vsyncadd [#allocation3], %s964
      %s967 = sshll.u32 [#allocation2], 4
      %s968 = int_to_ptr.vmem [resolvable:$true] %s967
      %970 = dma.vmem_to_hbm [thread:$0]  %s968, 32, %s6, [#allocation3]
    $region29: #{combined_forward.1} parent=1 // pred_fallthru
      _
    // Predicated region
    $region30: #{combined_forward.1} parent=1 // pred_check
      _
    $region31: #{combined_forward.1} parent=1 // pred_check_branch
      %972 = sbr.rel (0) target = $region33
    $region32: #{combined_forward.1} parent=1 // pred_region
      %s974 = ssub.s32 16, 16
      %975 = vsyncadd [#allocation4], %s974
      %978 = dma.smem_to_hbm [#allocation5], 16, %s7, [#allocation4]
    $region33: #{combined_forward.1} parent=1 // pred_fallthru
      _
    // Predicated region
    $region34: #{combined_forward.1} parent=1 // pred_check
      _
    $region35: #{combined_forward.1} parent=1 // pred_check_branch
      %980 = sbr.rel (0) target = $region37
    $region36: #{combined_forward.1} parent=1 // pred_region
      %981 = dma.done [#allocation3], 32
    $region37: #{combined_forward.1} parent=1 // pred_fallthru
      _
    // Predicated region
    $region38: #{combined_forward.1} parent=1 // pred_check
      _
    $region39: #{combined_forward.1} parent=1 // pred_check_branch
      %983 = sbr.rel (0) target = $region41
    $region40: #{combined_forward.1} parent=1 // pred_region
      %984 = dma.done [#allocation4], 16
    $region41: #{combined_forward.1} parent=1 // pred_fallthru
      _
    %985 = sfence
    %986 = vsyncpa [#allocation3], 1
    %987 = vsyncpa [#allocation4], 1

</llo_original>
